<compile_context>
chip_gen: v7x
topology: tpu7x:2x2x1
jax: 0.10.0
libtpu: 0.0.40
codegen_flags: <defaults>
</compile_context>

<pallas_src>
import jax
import jax.numpy as jnp
from jax.experimental import pallas as pl
from jax.experimental.pallas import tpu as pltpu


def cnn_kernel(ids_ref, sel_ref, emb_ref, w_ref, b_ref, out_ref):
    # ids_ref: (M, 1)    int32  token ids for this batch tile (M = bt*L)
    # sel_ref: (bt, M)   f32    selection matrix with mask * (1/len) folded in
    # emb_ref: (Vp, E)   bf16   embedding table (vocab padded, grid-invariant)
    # w_ref:   (3E, Hp)  bf16   fused conv taps [W_k0; W_k1; W_k2], padded to Hp
    # b_ref:   (1, Hp)   f32    conv bias (padded to Hp lanes)
    # out_ref: (bt, Hp)  f32    masked average (lane-dense; sliced to H outside)
    M = ids_ref.shape[0]
    bt, Hp = out_ref.shape
    L = M // bt
    Vp, E = emb_ref.shape

    # ---- embedding gather on the MXU (exact one-hot matmul, table in VMEM) ----
    ids = ids_ref[...]                                              # (M, 1)
    vocab = jax.lax.broadcasted_iota(jnp.int32, (M, Vp), 1)         # (M, Vp)
    one_hot = jnp.where(vocab == ids, 1.0, 0.0).astype(jnp.bfloat16)
    x = jnp.dot(one_hot, emb_ref[...], preferred_element_type=jnp.float32)  # (M, E)

    # ---- im2col on the input side: shift the E-wide rows (not the Hp-wide
    # conv outputs).  Per-sample boundaries in the flattened bt*L row axis are
    # zeroed with (row % L) masks so nothing leaks across samples.
    pos = jax.lax.broadcasted_iota(jnp.int32, (M, 1), 0) % L
    x_prev = jnp.where(pos == 0, 0.0, pltpu.roll(x, shift=1, axis=0))          # x[t-1]
    x_next = jnp.where(pos == L - 1, 0.0, pltpu.roll(x, shift=M - 1, axis=0))  # x[t+1]
    x3 = jnp.concatenate([x_prev, x, x_next], axis=1).astype(jnp.bfloat16)     # (M, 3E)

    # ---- fused 3-tap conv: ONE (M, 3E) @ (3E, Hp) bf16 matmul, f32 accum ----
    y = jnp.dot(x3, w_ref[...], preferred_element_type=jnp.float32)            # (M, Hp)
    act = jnp.tanh(y + b_ref[...])                                             # f32
    # TODO(synk): dropout (p=0.0 default / eval mode) is identity and omitted.

    # ---- masked average as a matmul: sel already folds mask and 1/sum(mask) ----
    out_ref[...] = jnp.dot(sel_ref[...], act, preferred_element_type=jnp.float32)


def _pick_batch_tile(B, L, row_target=4096):
    """Largest divisor bt of B with bt*L <= row_target matmul rows per step.

    bt must be a multiple of 8 (or equal B) so the (bt, ...) blocks satisfy the
    TPU (8, 128) sublane rule.  Among fitting choices, prefer those giving
    >= 2 grid steps so the "parallel" grid axis can shard across both v7x
    TensorCores (irrelevant on single-TC v5e/v6e).
    """
    valid = [d for d in range(1, B + 1) if B % d == 0 and (d == B or d % 8 == 0)]
    fitting = [d for d in valid if d * L <= row_target] or [min(valid)]
    multi = [d for d in fitting if B // d >= 2]
    return max(multi or fitting)


def cnn_forward(sentence_inp, mask, embeddings, conv_w, conv_b):
    """sentence_inp: (B, L) int; mask: (B, L) float.
    embeddings: (V, E); conv_w: (H, E, 3) [PyTorch Conv1d layout]; conv_b: (H,)."""
    B, L = sentence_inp.shape
    V, E = embeddings.shape
    H = conv_b.shape[0]
    Hp = ((H + 127) // 128) * 128      # lane-dense conv-output / final width
    Vp = ((V + 127) // 128) * 128      # one-hot contraction width

    bt = _pick_batch_tile(B, L)
    M = bt * L
    nt = B // bt

    # ---- layout / dtype prep (tiny, done once outside the kernel) ----
    ids = sentence_inp.astype(jnp.int32).reshape(B * L, 1)

    # Selection matrix: out[b] = sum_t mask[b,t]/len[b] * act[row(b,t)] with
    # row(b, t) = (b % bt)*L + t inside the tile that holds sample b.
    mf = mask.astype(jnp.float32)
    inv_len = 1.0 / jnp.sum(mf, axis=1, keepdims=True)   # (B, 1); inf if fully masked (parity with reference)
    wrow = mf * inv_len                                  # (B, L)
    in_slot = (jnp.arange(B)[:, None] % bt) == jnp.arange(bt)[None, :]   # (B, bt)
    sel = jnp.where(in_slot[:, :, None], wrow[:, None, :], 0.0).reshape(B, M)

    emb = jnp.zeros((Vp, E), jnp.bfloat16).at[:V, :].set(embeddings.astype(jnp.bfloat16))

    # Fused conv taps: row k*E + e holds conv_w[:, e, k] so that
    # [x[t-1] | x[t] | x[t+1]] @ w_cat reproduces Conv1d(kernel=3, padding=1).
    w_taps = jnp.transpose(conv_w.astype(jnp.float32), (2, 1, 0)).reshape(3 * E, H)
    w_cat = jnp.zeros((3 * E, Hp), jnp.float32).at[:, :H].set(w_taps).astype(jnp.bfloat16)
    b = jnp.zeros((1, Hp), jnp.float32).at[0, :H].set(conv_b.astype(jnp.float32))

    # NOTE: the grid-invariant inputs (emb, w_cat, b) could take
    # pipeline_mode=pl.Buffered(1) to drop their second VMEM buffer once the
    # embedding table is MiB-scale; negligible at these sizes, so left default.
    out = pl.pallas_call(
        cnn_kernel,
        out_shape=jax.ShapeDtypeStruct((B, Hp), jnp.float32),
        grid_spec=pltpu.PrefetchScalarGridSpec(
            num_scalar_prefetch=0,
            grid=(nt,),
            in_specs=[
                pl.BlockSpec((M, 1), lambda i: (i, 0)),          # token ids
                pl.BlockSpec((bt, M), lambda i: (i, 0)),         # selection matrix
                pl.BlockSpec((Vp, E), lambda i: (0, 0)),         # embedding table
                pl.BlockSpec((3 * E, Hp), lambda i: (0, 0)),     # fused conv taps
                pl.BlockSpec((1, Hp), lambda i: (0, 0)),         # bias
            ],
            out_specs=pl.BlockSpec((bt, Hp), lambda i: (i, 0)),
        ),
        compiler_params=pltpu.CompilerParams(
            dimension_semantics=("parallel",),       # batch tiles shard across v7x TCs
            vmem_limit_bytes=64 * 1024 * 1024),      # headroom for 4096-row tiles (v5e default 16 MiB)
    )(ids, sel, emb, w_cat, b)
    return out[:, :H]


def cnn_reference(sentence_inp, mask, embeddings, conv_w, conv_b):
    """Pure-JAX f32 reference mirroring the PyTorch forward."""
    x = jnp.take(embeddings, sentence_inp, axis=0).astype(jnp.float32)  # (B, L, E)
    x_nce = jnp.transpose(x, (0, 2, 1))                                 # (B, E, L)
    y = jax.lax.conv_general_dilated(
        x_nce, conv_w.astype(jnp.float32),
        window_strides=(1,), padding=((1, 1),),
        dimension_numbers=("NCH", "OIH", "NCH"))
    y = y + conv_b.astype(jnp.float32)[None, :, None]
    y = jnp.tanh(y)
    y = jnp.transpose(y, (0, 2, 1))                                     # (B, L, H)
    mf = mask.astype(jnp.float32)
    out_masked = y * mf[:, :, None]
    return out_masked.sum(axis=1) / mf.sum(axis=1, keepdims=True)


if __name__ == "__main__":
    key = jax.random.PRNGKey(0)
    k_emb, k_w, k_b, k_ids, k_len = jax.random.split(key, 5)

    B, L = 2, 16
    V, E, H = 50, 32, 32
    padding_idx = 0

    embeddings = jax.random.normal(k_emb, (V, E), dtype=jnp.float32)
    embeddings = embeddings.at[padding_idx].set(0.0)          # padding_idx row = 0
    conv_w = 0.1 * jax.random.normal(k_w, (H, E, 3), dtype=jnp.float32)
    conv_b = 0.1 * jax.random.normal(k_b, (H,), dtype=jnp.float32)

    sentence_inp = jax.random.randint(k_ids, (B, L), 0, V, dtype=jnp.int32)
    lengths = jax.random.randint(k_len, (B,), L // 2, L + 1)
    mask = (jnp.arange(L)[None, :] < lengths[:, None]).astype(jnp.float32)

    out = cnn_forward(sentence_inp, mask, embeddings, conv_w, conv_b)
    jax.block_until_ready(out)

    ref = cnn_reference(sentence_inp, mask, embeddings, conv_w, conv_b)
    assert out.shape == (B, H)
    # bf16 matmul inputs (f32 accumulation) -> compare at bf16-level tolerance.
    assert jnp.allclose(out, ref, atol=2e-2, rtol=2e-2), float(jnp.max(jnp.abs(out - ref)))

    print("KERNEL_OK")
</pallas_src>

<mosaic_0001>
module attributes {stable_mosaic.version = 11 : i64} {
  func.func @cnn_kernel(%arg0: i32, %arg1: memref<32x1xi32, #tpu.memory_space<vmem>>, %arg2: memref<2x32xf32, #tpu.memory_space<vmem>>, %arg3: memref<128x32xbf16, #tpu.memory_space<vmem>>, %arg4: memref<96x128xbf16, #tpu.memory_space<vmem>>, %arg5: memref<1x128xf32, #tpu.memory_space<vmem>>, %arg6: memref<2x128xf32, #tpu.memory_space<vmem>>) attributes {dimension_semantics = [#tpu.dimension_semantics<parallel>], iteration_bounds = array<i64: 1>, scalar_prefetch = 0 : i64, scratch_operands = 0 : i64, tpu.core_type = #tpu.core_type<tc>, window_params = [{transform_indices = @transform_0, window_bounds = array<i64: 32, 1>}, {transform_indices = @transform_1, window_bounds = array<i64: 2, 32>}, {pipeline_mode = #tpu.pipeline_mode<synchronous>, transform_indices = @transform_2, window_bounds = array<i64: 128, 32>}, {pipeline_mode = #tpu.pipeline_mode<synchronous>, transform_indices = @transform_3, window_bounds = array<i64: 96, 128>}, {pipeline_mode = #tpu.pipeline_mode<synchronous>, transform_indices = @transform_4, window_bounds = array<i64: 1, 128>}, {transform_indices = @transform_5, window_bounds = array<i64: 2, 128>}]} {
    %c0 = arith.constant 0 : index
    %c0_0 = arith.constant 0 : index
    %0 = vector.load %arg1[%c0, %c0_0] : memref<32x1xi32, #tpu.memory_space<vmem>>, vector<32x1xi32>
    %1 = tpu.iota {dimensions = array<i32: 1>} : vector<32x128xi32>
    %2 = vector.broadcast %0 : vector<32x1xi32> to vector<32x128xi32>
    %3 = arith.cmpi eq, %1, %2 : vector<32x128xi32>
    %cst = arith.constant 1.000000e+00 : f32
    %cst_1 = arith.constant 0.000000e+00 : f32
    %4 = vector.broadcast %cst : f32 to vector<32x128xf32>
    %5 = vector.broadcast %cst_1 : f32 to vector<32x128xf32>
    %6 = arith.select %3, %4, %5 : vector<32x128xi1>, vector<32x128xf32>
    %7 = arith.truncf %6 : vector<32x128xf32> to vector<32x128xbf16>
    %c0_2 = arith.constant 0 : index
    %c0_3 = arith.constant 0 : index
    %8 = vector.load %arg3[%c0_2, %c0_3] : memref<128x32xbf16, #tpu.memory_space<vmem>>, vector<128x32xbf16>
    %cst_4 = arith.constant dense<0.000000e+00> : vector<32x32xf32>
    %9 = tpu.matmul %7, %8, %cst_4 {dimension_numbers = #tpu.dot_dimension_numbers<[1], [0], [0], [1], [0, 0, 1, 1], [], []>} : vector<32x128xbf16>, vector<128x32xbf16>, vector<32x32xf32> -> vector<32x32xf32>
    %10 = tpu.iota {dimensions = array<i32: 0>} : vector<32x1xi32>
    %c16_i32 = arith.constant 16 : i32
    %c0_i32 = arith.constant 0 : i32
    %11 = arith.cmpi eq, %c16_i32, %c0_i32 : i32
    %c1_i32 = arith.constant 1 : i32
    %12 = arith.select %11, %c1_i32, %c16_i32 : i32
    %13 = vector.broadcast %12 : i32 to vector<32x1xi32>
    %14 = arith.remsi %10, %13 : vector<32x1xi32>
    %c0_i32_5 = arith.constant 0 : i32
    %15 = vector.broadcast %c0_i32_5 : i32 to vector<32x1xi32>
    %16 = arith.cmpi ne, %14, %15 : vector<32x1xi32>
    %c0_i32_6 = arith.constant 0 : i32
    %17 = vector.broadcast %c0_i32_6 : i32 to vector<32x1xi32>
    %18 = arith.cmpi slt, %14, %17 : vector<32x1xi32>
    %c0_i32_7 = arith.constant 0 : i32
    %19 = arith.cmpi slt, %12, %c0_i32_7 : i32
    %20 = vector.broadcast %19 : i1 to vector<32x1xi1>
    %21 = vector.broadcast %20 : vector<32x1xi1> to vector<32x1xi1>
    %22 = arith.xori %18, %21 : vector<32x1xi1>
    %23 = arith.andi %22, %16 : vector<32x1xi1>
    %24 = vector.broadcast %12 : i32 to vector<32x1xi32>
    %25 = arith.addi %14, %24 : vector<32x1xi32>
    %26 = arith.select %23, %25, %14 : vector<32x1xi1>, vector<32x1xi32>
    %c0_i32_8 = arith.constant 0 : i32
    %27 = vector.broadcast %c0_i32_8 : i32 to vector<32x1xi32>
    %28 = arith.cmpi eq, %26, %27 : vector<32x1xi32>
    %c1_i32_9 = arith.constant 1 : i32
    %29 = tpu.dynamic_rotate %9 by %c1_i32_9 dim 0 : vector<32x32xf32>, i32 -> vector<32x32xf32>
    %cst_10 = arith.constant 0.000000e+00 : f32
    %30 = vector.shape_cast %28 : vector<32x1xi1> to vector<32x1xi1>
    %31 = vector.broadcast %30 : vector<32x1xi1> to vector<32x32xi1>
    %32 = vector.broadcast %cst_10 : f32 to vector<32x32xf32>
    %33 = arith.select %31, %32, %29 : vector<32x32xi1>, vector<32x32xf32>
    %c15_i32 = arith.constant 15 : i32
    %34 = vector.broadcast %c15_i32 : i32 to vector<32x1xi32>
    %35 = arith.cmpi eq, %26, %34 : vector<32x1xi32>
    %c31_i32 = arith.constant 31 : i32
    %36 = tpu.dynamic_rotate %9 by %c31_i32 dim 0 : vector<32x32xf32>, i32 -> vector<32x32xf32>
    %cst_11 = arith.constant 0.000000e+00 : f32
    %37 = vector.shape_cast %35 : vector<32x1xi1> to vector<32x1xi1>
    %38 = vector.broadcast %37 : vector<32x1xi1> to vector<32x32xi1>
    %39 = vector.broadcast %cst_11 : f32 to vector<32x32xf32>
    %40 = arith.select %38, %39, %36 : vector<32x32xi1>, vector<32x32xf32>
    %41 = tpu.concatenate %33, %9, %40 in 1 : vector<32x32xf32>, vector<32x32xf32>, vector<32x32xf32> -> vector<32x96xf32>
    %42 = arith.truncf %41 : vector<32x96xf32> to vector<32x96xbf16>
    %c0_12 = arith.constant 0 : index
    %c0_13 = arith.constant 0 : index
    %43 = vector.load %arg4[%c0_12, %c0_13] : memref<96x128xbf16, #tpu.memory_space<vmem>>, vector<96x128xbf16>
    %cst_14 = arith.constant dense<0.000000e+00> : vector<32x128xf32>
    %44 = tpu.matmul %42, %43, %cst_14 {dimension_numbers = #tpu.dot_dimension_numbers<[1], [0], [0], [1], [0, 0, 1, 1], [], []>} : vector<32x96xbf16>, vector<96x128xbf16>, vector<32x128xf32> -> vector<32x128xf32>
    %c0_15 = arith.constant 0 : index
    %c0_16 = arith.constant 0 : index
    %45 = vector.load %arg5[%c0_15, %c0_16] : memref<1x128xf32, #tpu.memory_space<vmem>>, vector<1x128xf32>
    %46 = vector.broadcast %45 : vector<1x128xf32> to vector<32x128xf32>
    %47 = arith.addf %44, %46 : vector<32x128xf32>
    %48 = math.tanh %47 : vector<32x128xf32>
    %c0_17 = arith.constant 0 : index
    %c0_18 = arith.constant 0 : index
    %49 = vector.load %arg2[%c0_17, %c0_18] : memref<2x32xf32, #tpu.memory_space<vmem>>, vector<2x32xf32>
    %cst_19 = arith.constant dense<0.000000e+00> : vector<2x128xf32>
    %50 = tpu.matmul %49, %48, %cst_19 {dimension_numbers = #tpu.dot_dimension_numbers<[1], [0], [0], [1], [0, 0, 1, 1], [], []>} : vector<2x32xf32>, vector<32x128xf32>, vector<2x128xf32> -> vector<2x128xf32>
    %c0_20 = arith.constant 0 : index
    %c0_21 = arith.constant 0 : index
    %51 = vector.load %arg6[%c0_20, %c0_21] : memref<2x128xf32, #tpu.memory_space<vmem>>, vector<2x128xf32>
    tpu.vector_store %arg6[%c0_20, %c0_21], %50 {strides = array<i32>} : memref<2x128xf32, #tpu.memory_space<vmem>>, vector<2x128xf32>,
    return
  }
  func.func @transform_0(%arg0: i32) -> (i32, i32) {
    %c0_i32 = arith.constant 0 : i32
    %c0_i32_0 = arith.constant 0 : i32
    return %arg0, %c0_i32 : i32, i32
  }
  func.func @transform_1(%arg0: i32) -> (i32, i32) {
    %c0_i32 = arith.constant 0 : i32
    %c0_i32_0 = arith.constant 0 : i32
    return %arg0, %c0_i32 : i32, i32
  }
  func.func @transform_2(%arg0: i32) -> (i32, i32) {
    %c0_i32 = arith.constant 0 : i32
    %c0_i32_0 = arith.constant 0 : i32
    %c0_i32_1 = arith.constant 0 : i32
    return %c0_i32, %c0_i32_0 : i32, i32
  }
  func.func @transform_3(%arg0: i32) -> (i32, i32) {
    %c0_i32 = arith.constant 0 : i32
    %c0_i32_0 = arith.constant 0 : i32
    %c0_i32_1 = arith.constant 0 : i32
    return %c0_i32, %c0_i32_0 : i32, i32
  }
  func.func @transform_4(%arg0: i32) -> (i32, i32) {
    %c0_i32 = arith.constant 0 : i32
    %c0_i32_0 = arith.constant 0 : i32
    %c0_i32_1 = arith.constant 0 : i32
    return %c0_i32, %c0_i32_0 : i32, i32
  }
  func.func @transform_5(%arg0: i32) -> (i32, i32) {
    %c0_i32 = arith.constant 0 : i32
    %c0_i32_0 = arith.constant 0 : i32
    return %arg0, %c0_i32 : i32, i32
  }
}

</mosaic_0001>

<llo_original>
// kernel: tpu_custom_call.1
$region0: #{tpu_custom_call.1}
  #allocation0 [shape = 'u32[]', space=smem, size = 0x4, offset = 0x4, fixed_abs, tag = 'smem constant byte address 0x4 - core index']
  #allocation1 [shape = 'u32[144,128]{1,0:T(1,128)}', space=vmem, size = 0x12000, scoped, tag = 'internal scratch']
  %s0 = inlined_call_operand.hbm [shape: s32[32,1], index: 0, kind: input, shape index: {}]
  %s1 = inlined_call_operand.hbm [shape: f32[2,32], index: 1, kind: input, shape index: {}]
  %s2 = inlined_call_operand.hbm [shape: bf16[128,32], index: 2, kind: input, shape index: {}]
  %s3 = inlined_call_operand.hbm [shape: bf16[96,128], index: 3, kind: input, shape index: {}]
  %s4 = inlined_call_operand.hbm [shape: f32[1,128], index: 4, kind: input, shape index: {}]
  %s5 = inlined_call_operand.hbm [shape: f32[2,128], index: 5, kind: output, shape index: {}]
  %s6 = sld [smem:[#allocation0]]
  $region50: #{tpu_custom_call.1} parent=0
    _
  %s8 = ssub.s32 1, %s6
  %s9 = scalar_select 0, %s8, %s6
  $region1: #{tpu_custom_call.1} parent=0
    #allocation2 [shape = 'u8[16384]{0}', space=vmem, size = 0x4000, scoped, tag = 'input window, operand 0, single buffered']
    #allocation3 [shape = 's32[1]{0}', space=sflag, size = 0x4, scoped, tag = 'scoped memory for tpu_custom_call.1']
    #allocation4 [shape = 's32[1]{0}', space=sflag, size = 0x4, scoped, tag = 'scoped memory for tpu_custom_call.1']
    #allocation5 [shape = 'u8[1024]{0}', space=vmem, size = 0x400, scoped, tag = 'input window, operand 1, single buffered']
    #allocation6 [shape = 's32[1]{0}', space=sflag, size = 0x4, scoped, tag = 'scoped memory for tpu_custom_call.1']
    #allocation7 [shape = 'u8[32768]{0}', space=vmem, size = 0x8000, scoped, tag = 'input window, operand 2, single buffered']
    #allocation8 [shape = 'u8[24576]{0}', space=vmem, size = 0x6000, scoped, tag = 'input window, operand 3, single buffered']
    #allocation9 [shape = 's32[1]{0}', space=sflag, size = 0x4, scoped, tag = 'scoped memory for tpu_custom_call.1']
    #allocation10 [shape = 'u8[512]{0}', space=vmem, size = 0x400, scoped, tag = 'input window, operand 4, single buffered']
    #allocation11 [shape = 'u8[1024]{0}', space=vmem, size = 0x400, scoped, tag = 'output window, operand 0, single buffered']
    %10 = vsyncpa [#allocation3], 0
    %11 = vsyncpa [#allocation6], 0
    %12 = vsyncpa [#allocation9], 0
    %13 = vsyncpa [#allocation4], 0
    // Predicated region
    $region2: #{tpu_custom_call.1} parent=1 // pred_check
      _
    $region3: #{tpu_custom_call.1} parent=1 // pred_check_branch
      %15 = sbr.rel (0) target = $region5
    $region4: #{tpu_custom_call.1} parent=1 // pred_region
      %s17 = ssub.s32 512, 512
      %18 = vsyncadd [#allocation3], %s17
      %s19 = sshll.u32 [#allocation2], 4
      %s20 = int_to_ptr.vmem [resolvable:$true] %s19
      %25 = dma.hbm_to_vmem [thread:$0]  %s0, 512, %s20, [#allocation3], 128, 128, 8
    $region5: #{tpu_custom_call.1} parent=1 // pred_fallthru
      _
    // Predicated region
    $region6: #{tpu_custom_call.1} parent=1 // pred_check
      _
    $region7: #{tpu_custom_call.1} parent=1 // pred_check_branch
      %27 = sbr.rel (0) target = $region9
    $region8: #{tpu_custom_call.1} parent=1 // pred_region
      %s29 = ssub.s32 32, 32
      %30 = vsyncadd [#allocation6], %s29
      %s32 = sshll.u32 [#allocation5], 4
      %s33 = int_to_ptr.vmem [resolvable:$true] %s32
      %35 = dma.hbm_to_vmem [thread:$0]  %s1, 32, %s33, [#allocation6]
    $region9: #{tpu_custom_call.1} parent=1 // pred_fallthru
      _
    // Predicated region
    $region10: #{tpu_custom_call.1} parent=1 // pred_check
      _
    $region11: #{tpu_custom_call.1} parent=1 // pred_check_branch
      %37 = sbr.rel (0) target = $region13
    $region12: #{tpu_custom_call.1} parent=1 // pred_region
      %s39 = ssub.s32 1024, 1024
      %40 = vsyncadd [#allocation6], %s39
      %s41 = sshll.u32 [#allocation7], 4
      %s42 = int_to_ptr.vmem [resolvable:$true] %s41
      %47 = dma.hbm_to_vmem [thread:$0]  %s2, 1024, %s42, [#allocation6], 64, 64, 4
    $region13: #{tpu_custom_call.1} parent=1 // pred_fallthru
      _
    // Predicated region
    $region14: #{tpu_custom_call.1} parent=1 // pred_check
      _
    $region15: #{tpu_custom_call.1} parent=1 // pred_check_branch
      %49 = sbr.rel (0) target = $region17
    $region16: #{tpu_custom_call.1} parent=1 // pred_region
      %s51 = ssub.s32 768, 768
      %52 = vsyncadd [#allocation9], %s51
      %s53 = sshll.u32 [#allocation8], 4
      %s54 = int_to_ptr.vmem [resolvable:$true] %s53
      %59 = dma.hbm_to_vmem [thread:$0]  %s3, 768, %s54, [#allocation9], 64, 64, 4
    $region17: #{tpu_custom_call.1} parent=1 // pred_fallthru
      _
    // Predicated region
    $region18: #{tpu_custom_call.1} parent=1 // pred_check
      _
    $region19: #{tpu_custom_call.1} parent=1 // pred_check_branch
      %61 = sbr.rel (0) target = $region21
    $region20: #{tpu_custom_call.1} parent=1 // pred_region
      %s63 = ssub.s32 16, 16
      %64 = vsyncadd [#allocation9], %s63
      %s66 = sshll.u32 [#allocation10], 4
      %s67 = int_to_ptr.vmem [resolvable:$true] %s66
      %69 = dma.hbm_to_vmem [thread:$0]  %s4, 16, %s67, [#allocation9]
    $region21: #{tpu_custom_call.1} parent=1 // pred_fallthru
      _
    // Predicated region
    $region22: #{tpu_custom_call.1} parent=1 // pred_check
      _
    $region23: #{tpu_custom_call.1} parent=1 // pred_check_branch
      %71 = sbr.rel (0) target = $region25
    $region24: #{tpu_custom_call.1} parent=1 // pred_region
      %72 = dma.done [#allocation3], 512
    $region25: #{tpu_custom_call.1} parent=1 // pred_fallthru
      _
    // Predicated region
    $region26: #{tpu_custom_call.1} parent=1 // pred_check
      _
    $region27: #{tpu_custom_call.1} parent=1 // pred_check_branch
      %74 = sbr.rel (0) target = $region29
    $region28: #{tpu_custom_call.1} parent=1 // pred_region
      %75 = dma.done [#allocation6], 32
    $region29: #{tpu_custom_call.1} parent=1 // pred_fallthru
      _
    // Predicated region
    $region30: #{tpu_custom_call.1} parent=1 // pred_check
      _
    $region31: #{tpu_custom_call.1} parent=1 // pred_check_branch
      %77 = sbr.rel (0) target = $region33
    $region32: #{tpu_custom_call.1} parent=1 // pred_region
      %78 = dma.done [#allocation6], 1024
    $region33: #{tpu_custom_call.1} parent=1 // pred_fallthru
      _
    // Predicated region
    $region34: #{tpu_custom_call.1} parent=1 // pred_check
      _
    $region35: #{tpu_custom_call.1} parent=1 // pred_check_branch
      %80 = sbr.rel (0) target = $region37
    $region36: #{tpu_custom_call.1} parent=1 // pred_region
      %81 = dma.done [#allocation9], 768
    $region37: #{tpu_custom_call.1} parent=1 // pred_fallthru
      _
    // Predicated region
    $region38: #{tpu_custom_call.1} parent=1 // pred_check
      _
    $region39: #{tpu_custom_call.1} parent=1 // pred_check_branch
      %83 = sbr.rel (0) target = $region41
    $region40: #{tpu_custom_call.1} parent=1 // pred_region
      %84 = dma.done [#allocation9], 16
    $region41: #{tpu_custom_call.1} parent=1 // pred_fallthru
      _
    %v86 = vld [vmem:[#allocation2] sm:$0xff]
    %v87 = vld [vmem:[#allocation2 + $0x8] sm:$0xff]
    %v88 = vld [vmem:[#allocation2 + $0x10] sm:$0xff]
    %v89 = vld [vmem:[#allocation2 + $0x18] sm:$0xff]
    %v90 = vlaneseq
    %v91 = vand.u32 %v90, 127
    %92 = vset.pattern.permute.xlu0 0
    %93 = vperm.xlu0 %92, %v86
    %v94 = vpop.permute.xlu0 %93
    %95 = vset.pattern.permute.xlu0 0
    %96 = vperm.xlu0 %95, %v87
    %v97 = vpop.permute.xlu0 %96
    %98 = vset.pattern.permute.xlu0 0
    %99 = vperm.xlu0 %98, %v88
    %v100 = vpop.permute.xlu0 %99
    %101 = vset.pattern.permute.xlu0 0
    %102 = vperm.xlu0 %101, %v89
    %v103 = vpop.permute.xlu0 %102
    %vm104 = vcmp.eq.s32.totalorder %v91, %v94
    %vm105 = vcmp.eq.s32.totalorder %v91, %v97
    %vm106 = vcmp.eq.s32.totalorder %v91, %v100
    %vm107 = vcmp.eq.s32.totalorder %v91, %v103
    %v108 = vsel %vm104, 1.0, 0.0
    %v109 = vsel %vm105, 1.0, 0.0
    %v110 = vsel %vm106, 1.0, 0.0
    %v111 = vsel %vm107, 1.0, 0.0
    %v112 = vpack.c.bf16 %v109, %v108
    %v113 = vpack.c.bf16 %v111, %v110
    %v114 = vld [vmem:[#allocation7] sm:$0xf]
    %v115 = vld [vmem:[#allocation7 + $0x4] sm:$0xf]
    %v116 = vld [vmem:[#allocation7 + $0x8] sm:$0xf]
    %v117 = vld [vmem:[#allocation7 + $0xc] sm:$0xf]
    %v118 = vld [vmem:[#allocation7 + $0x10] sm:$0xf]
    %v119 = vld [vmem:[#allocation7 + $0x14] sm:$0xf]
    %v120 = vld [vmem:[#allocation7 + $0x18] sm:$0xf]
    %v121 = vld [vmem:[#allocation7 + $0x1c] sm:$0xf]
    %v122 = vld [vmem:[#allocation7 + $0x20] sm:$0xf]
    %v123 = vld [vmem:[#allocation7 + $0x24] sm:$0xf]
    %v124 = vld [vmem:[#allocation7 + $0x28] sm:$0xf]
    %v125 = vld [vmem:[#allocation7 + $0x2c] sm:$0xf]
    %v126 = vld [vmem:[#allocation7 + $0x30] sm:$0xf]
    %v127 = vld [vmem:[#allocation7 + $0x34] sm:$0xf]
    %v128 = vld [vmem:[#allocation7 + $0x38] sm:$0xf]
    %v129 = vld [vmem:[#allocation7 + $0x3c] sm:$0xf]
    %v146 = vunpack.c.l.b16 %v114
    %v147 = vunpack.c.l.b16 %v115
    %v148 = vunpack.c.l.b16 %v116
    %v149 = vunpack.c.l.b16 %v117
    %v150 = vunpack.c.l.b16 %v118
    %v151 = vunpack.c.l.b16 %v119
    %v152 = vunpack.c.l.b16 %v120
    %v153 = vunpack.c.l.b16 %v121
    %v154 = vunpack.c.l.b16 %v122
    %v155 = vunpack.c.l.b16 %v123
    %v156 = vunpack.c.l.b16 %v124
    %v157 = vunpack.c.l.b16 %v125
    %v158 = vunpack.c.l.b16 %v126
    %v159 = vunpack.c.l.b16 %v127
    %v160 = vunpack.c.l.b16 %v128
    %v161 = vunpack.c.l.b16 %v129
    %v162 = vpack.c.b16 %v147, %v146
    %v163 = vpack.c.b16 %v149, %v148
    %v164 = vpack.c.b16 %v151, %v150
    %v165 = vpack.c.b16 %v153, %v152
    %v166 = vpack.c.b16 %v155, %v154
    %v167 = vpack.c.b16 %v157, %v156
    %v168 = vpack.c.b16 %v159, %v158
    %v169 = vpack.c.b16 %v161, %v160
    %178 = vmatprep.subr.bf16.mxu0 0
    %179 = vmatpush1.bf16.msra.mxu0 %v162
    %180 = vmatprep.subr.bf16.mxu0 0
    %181 = vmatpush1.bf16.msra.mxu0 %v163
    %182 = vmatprep.subr.bf16.mxu0 0
    %183 = vmatpush1.bf16.msra.mxu0 %v164
    %184 = vmatprep.subr.bf16.mxu0 0
    %185 = vmatpush1.bf16.msra.mxu0 %v165
    %186 = vmatprep.subr.bf16.mxu0 0
    %187 = vmatpush1.bf16.msra.mxu0 %v166
    %188 = vmatprep.subr.bf16.mxu0 0
    %189 = vmatpush1.bf16.msra.mxu0 %v167
    %190 = vmatprep.subr.bf16.mxu0 0
    %191 = vmatpush1.bf16.msra.mxu0 %v168
    %192 = vmatprep.subr.bf16.mxu0 0
    %193 = vmatpush1.bf16.msra.mxu0 %v169
    %194 = vmatprep.subr.bf16.mxu0 0
    %195 = vmatpush1.bf16.msra.mxu0 0
    %196 = vmatprep.subr.bf16.mxu0 0
    %197 = vmatpush1.bf16.msra.mxu0 0
    %198 = vmatprep.subr.bf16.mxu0 0
    %199 = vmatpush1.bf16.msra.mxu0 0
    %200 = vmatprep.subr.bf16.mxu0 0
    %201 = vmatpush1.bf16.msra.mxu0 0
    %202 = vmatprep.subr.bf16.mxu0 0
    %203 = vmatpush1.bf16.msra.mxu0 0
    %204 = vmatprep.subr.bf16.mxu0 0
    %205 = vmatpush1.bf16.msra.mxu0 0
    %206 = vmatprep.subr.bf16.mxu0 0
    %207 = vmatpush1.bf16.msra.mxu0 0
    %208 = vmatprep.subr.bf16.mxu0 0
    %209 = vmatpush1.bf16.msra.mxu0 0
    %210 = vmatprep.mubr.bf16.mxu0 0
    %211 = vmatmul.mubr.bf16.gmra.mrb[0].mxu0 %v112
    %v212 = vpop.f32.mrb[0].mxu0
    %v213 = vadd.f32 0.0, %v212
    %v214 = vpop.f32.mrb[0].mxu0
    %v215 = vpop.f32.mrb[0].mxu0
    %v216 = vadd.f32 0.0, %v215
    %v217 = vpop.f32.mrb[0].mxu0
    %218 = vmatprep.mubr.bf16.mxu0 0
    %219 = vmatmul.mubr.bf16.gmra.mrb[0].mxu0 %v113
    %v220 = vpop.f32.mrb[0].mxu0
    %v221 = vadd.f32 0.0, %v220
    %v222 = vpop.f32.mrb[0].mxu0
    %v223 = vpop.f32.mrb[0].mxu0
    %v224 = vadd.f32 0.0, %v223
    %v225 = vpop.f32.mrb[0].mxu0
    %226 = vdwg.mxu0
    %v227 = vlaneseq
    %v228 = vshrl.u32 %v227, 7
    %v229 = vadd.s32 %v228, 8
    %v230 = vadd.s32 %v228, 16
    %v231 = vadd.s32 %v228, 24
    %vm232 = vcmp.lt.s32.totalorder %v228, 0
    %v233 = vsub.s32 0, %v228
    %v234 = vsel %vm232, %v233, %v228
    %v235 = vshrl.u32 %v234, 4
    %v236 = vand.u32 %v234, 15
    %v237 = vsub.s32 0, %v236
    %v238 = vsel %vm232, %v237, %v236
    %vm239 = vcmp.lt.s32.totalorder %v229, 0
    %v240 = vsub.s32 0, %v229
    %v241 = vsel %vm239, %v240, %v229
    %v242 = vshrl.u32 %v241, 4
    %v243 = vand.u32 %v241, 15
    %v244 = vsub.s32 0, %v243
    %v245 = vsel %vm239, %v244, %v243
    %vm246 = vcmp.lt.s32.totalorder %v230, 0
    %v247 = vsub.s32 0, %v230
    %v248 = vsel %vm246, %v247, %v230
    %v249 = vshrl.u32 %v248, 4
    %v250 = vand.u32 %v248, 15
    %v251 = vsub.s32 0, %v250
    %v252 = vsel %vm246, %v251, %v250
    %vm253 = vcmp.lt.s32.totalorder %v231, 0
    %v254 = vsub.s32 0, %v231
    %v255 = vsel %vm253, %v254, %v231
    %v256 = vshrl.u32 %v255, 4
    %v257 = vand.u32 %v255, 15
    %v258 = vsub.s32 0, %v257
    %v259 = vsel %vm253, %v258, %v257
    %vm260 = vcmp.ne.s32.totalorder %v238, 0
    %vm261 = vcmp.ne.s32.totalorder %v245, 0
    %vm262 = vcmp.ne.s32.totalorder %v252, 0
    %vm263 = vcmp.ne.s32.totalorder %v259, 0
    %vm264 = vcmp.lt.s32.totalorder %v238, 0
    %vm265 = vcmp.lt.s32.totalorder %v245, 0
    %vm266 = vcmp.lt.s32.totalorder %v252, 0
    %vm267 = vcmp.lt.s32.totalorder %v259, 0
    %vm268 = vmand %vm264, %vm260
    %vm269 = vmand %vm265, %vm261
    %vm270 = vmand %vm266, %vm262
    %vm271 = vmand %vm267, %vm263
    %v272 = vadd.s32 %v238, 16
    %v273 = vadd.s32 %v245, 16
    %v274 = vadd.s32 %v252, 16
    %v275 = vadd.s32 %v259, 16
    %v276 = vsel %vm268, %v272, %v238
    %v277 = vsel %vm269, %v273, %v245
    %v278 = vsel %vm270, %v274, %v252
    %v279 = vsel %vm271, %v275, %v259
    %vm280 = vcmp.eq.s32.totalorder %v276, 0
    %vm281 = vcmp.eq.s32.totalorder %v277, 0
    %vm282 = vcmp.eq.s32.totalorder %v278, 0
    %vm283 = vcmp.eq.s32.totalorder %v279, 0
    %v284 = vrot.slane %v213, 7
    %v285 = vrot.slane %v216, 7
    %v286 = vrot.slane %v221, 7
    %v287 = vrot.slane %v224, 7
    %vm288 = vcmp.lt.s32.totalorder %v228, 1
    %v289 = vsel %vm288, %v286, %v287
    %v290 = vsel %vm288, %v285, %v286
    %v291 = vsel %vm288, %v284, %v285
    %v292 = vsel %vm288, %v287, %v284
    %v293 = vsel %vm280, 1, 0
    %v294 = vsel %vm281, 1, 0
    %v295 = vsel %vm282, 1, 0
    %v296 = vsel %vm283, 1, 0
    %vm297 = vcmp.eq.s32.totalorder %v293, 1
    %vm298 = vcmp.eq.s32.totalorder %v294, 1
    %vm299 = vcmp.eq.s32.totalorder %v295, 1
    %vm300 = vcmp.eq.s32.totalorder %v296, 1
    %v301 = vsel %vm297, 0.0, %v292
    %v302 = vsel %vm298, 0.0, %v291
    %v303 = vsel %vm299, 0.0, %v290
    %v304 = vsel %vm300, 0.0, %v289
    %vm305 = vcmp.eq.s32.totalorder %v276, 15
    %vm306 = vcmp.eq.s32.totalorder %v277, 15
    %vm307 = vcmp.eq.s32.totalorder %v278, 15
    %vm308 = vcmp.eq.s32.totalorder %v279, 15
    %v309 = vrot.slane %v213, 1
    %v310 = vrot.slane %v216, 1
    %v311 = vrot.slane %v221, 1
    %v312 = vrot.slane %v224, 1
    %vm313 = vcmp.lt.s32.totalorder %v228, 7
    %v314 = vsel %vm313, %v311, %v312
    %v315 = vsel %vm313, %v310, %v311
    %v316 = vsel %vm313, %v309, %v310
    %v317 = vsel %vm313, %v312, %v309
    %v318 = vsel %vm305, 1, 0
    %v319 = vsel %vm306, 1, 0
    %v320 = vsel %vm307, 1, 0
    %v321 = vsel %vm308, 1, 0
    %vm322 = vcmp.eq.s32.totalorder %v318, 1
    %vm323 = vcmp.eq.s32.totalorder %v319, 1
    %vm324 = vcmp.eq.s32.totalorder %v320, 1
    %vm325 = vcmp.eq.s32.totalorder %v321, 1
    %v326 = vsel %vm322, 0.0, %v316
    %v327 = vsel %vm323, 0.0, %v315
    %v328 = vsel %vm324, 0.0, %v314
    %v329 = vsel %vm325, 0.0, %v317
    %334 = vrot.lane.b32.xlu0 %v213, 32
    %v335 = vpop.permute.xlu0 %334
    %336 = vrot.lane.b32.xlu0 %v216, 32
    %v337 = vpop.permute.xlu0 %336
    %338 = vrot.lane.b32.xlu0 %v221, 32
    %v339 = vpop.permute.xlu0 %338
    %340 = vrot.lane.b32.xlu0 %v224, 32
    %v341 = vpop.permute.xlu0 %340
    %350 = vrot.lane.b32.xlu0 %v326, 64
    %v351 = vpop.permute.xlu0 %350
    %352 = vrot.lane.b32.xlu0 %v327, 64
    %v353 = vpop.permute.xlu0 %352
    %354 = vrot.lane.b32.xlu0 %v328, 64
    %v355 = vpop.permute.xlu0 %354
    %356 = vrot.lane.b32.xlu0 %v329, 64
    %v357 = vpop.permute.xlu0 %356
    %vm362 = vcmask 261120
    %v363 = vsel %vm362, %v301, %v335
    %v364 = vsel %vm362, %v302, %v337
    %v365 = vsel %vm362, %v303, %v339
    %v366 = vsel %vm362, %v304, %v341
    %vm367 = vcmask 523264
    %v368 = vsel %vm367, %v363, %v351
    %v369 = vsel %vm367, %v364, %v353
    %v370 = vsel %vm367, %v365, %v355
    %v371 = vsel %vm367, %v366, %v357
    %v372 = vpack.c.bf16 %v369, %v368
    %v373 = vpack.c.bf16 %v371, %v370
    %v374 = vld [vmem:[#allocation8] sm:$0xf]
    %v375 = vld [vmem:[#allocation8 + $0x4] sm:$0xf]
    %v376 = vld [vmem:[#allocation8 + $0x8] sm:$0xf]
    %v377 = vld [vmem:[#allocation8 + $0xc] sm:$0xf]
    %v378 = vld [vmem:[#allocation8 + $0x10] sm:$0xf]
    %v379 = vld [vmem:[#allocation8 + $0x14] sm:$0xf]
    %v380 = vld [vmem:[#allocation8 + $0x18] sm:$0xf]
    %v381 = vld [vmem:[#allocation8 + $0x1c] sm:$0xf]
    %v382 = vld [vmem:[#allocation8 + $0x20] sm:$0xf]
    %v383 = vld [vmem:[#allocation8 + $0x24] sm:$0xf]
    %v384 = vld [vmem:[#allocation8 + $0x28] sm:$0xf]
    %v385 = vld [vmem:[#allocation8 + $0x2c] sm:$0xf]
    %v386 = vld [vmem:[#allocation10] sm:$0x1]
    %v388 = vlaneseq
    %v389 = vshrl.u32 %v388, 7
    %v390 = vsub.s32 0, %v389
    %v391 = vrot.slane %v386, %v390
    %v405 = vunpack.c.l.b16 %v374
    %v406 = vunpack.c.l.b16 %v375
    %v407 = vunpack.c.l.b16 %v376
    %v408 = vunpack.c.l.b16 %v377
    %v409 = vunpack.c.l.b16 %v378
    %v410 = vunpack.c.l.b16 %v379
    %v411 = vunpack.c.l.b16 %v380
    %v412 = vunpack.c.l.b16 %v381
    %v413 = vunpack.c.l.b16 %v382
    %v414 = vunpack.c.l.b16 %v383
    %v415 = vunpack.c.l.b16 %v384
    %v416 = vunpack.c.l.b16 %v385
    %v417 = vpack.c.b16 %v406, %v405
    %v418 = vpack.c.b16 %v408, %v407
    %v419 = vpack.c.b16 %v410, %v409
    %v420 = vpack.c.b16 %v412, %v411
    %v421 = vpack.c.b16 %v414, %v413
    %v422 = vpack.c.b16 %v416, %v415
    %vm429 = vcmask 785408
    %v431 = vsel %vm429, %v372, 0
    %v434 = vsel %vm429, %v373, 0
    %436 = vmatprep.subr.bf16.mxu0 0
    %437 = vmatpush1.bf16.msra.mxu0 %v417
    %438 = vmatprep.subr.bf16.mxu0 0
    %439 = vmatpush1.bf16.msra.mxu0 %v418
    %440 = vmatprep.subr.bf16.mxu0 0
    %441 = vmatpush1.bf16.msra.mxu0 %v419
    %442 = vmatprep.subr.bf16.mxu0 0
    %443 = vmatpush1.bf16.msra.mxu0 %v420
    %444 = vmatprep.subr.bf16.mxu0 0
    %445 = vmatpush1.bf16.msra.mxu0 %v421
    %446 = vmatprep.subr.bf16.mxu0 0
    %447 = vmatpush1.bf16.msra.mxu0 %v422
    %448 = vmatprep.subr.bf16.mxu0 0
    %449 = vmatpush1.bf16.msra.mxu0 0
    %450 = vmatprep.subr.bf16.mxu0 0
    %451 = vmatpush1.bf16.msra.mxu0 0
    %452 = vmatprep.subr.bf16.mxu0 0
    %453 = vmatpush1.bf16.msra.mxu0 0
    %454 = vmatprep.subr.bf16.mxu0 0
    %455 = vmatpush1.bf16.msra.mxu0 0
    %456 = vmatprep.subr.bf16.mxu0 0
    %457 = vmatpush1.bf16.msra.mxu0 0
    %458 = vmatprep.subr.bf16.mxu0 0
    %459 = vmatpush1.bf16.msra.mxu0 0
    %460 = vmatprep.subr.bf16.mxu0 0
    %461 = vmatpush1.bf16.msra.mxu0 0
    %462 = vmatprep.subr.bf16.mxu0 0
    %463 = vmatpush1.bf16.msra.mxu0 0
    %464 = vmatprep.subr.bf16.mxu0 0
    %465 = vmatpush1.bf16.msra.mxu0 0
    %466 = vmatprep.subr.bf16.mxu0 0
    %467 = vmatpush1.bf16.msra.mxu0 0
    %468 = vmatprep.mubr.bf16.mxu0 0
    %469 = vmatmul.mubr.bf16.gmra.mrb[0].mxu0 %v431
    %v470 = vpop.f32.mrb[0].mxu0
    %v471 = vadd.f32 %v391, %v470
    %v472 = vpop.f32.mrb[0].mxu0
    %v473 = vpop.f32.mrb[0].mxu0
    %v474 = vadd.f32 %v391, %v473
    %v475 = vpop.f32.mrb[0].mxu0
    %476 = vmatprep.mubr.bf16.mxu0 0
    %477 = vmatmul.mubr.bf16.gmra.mrb[0].mxu0 %v434
    %v478 = vpop.f32.mrb[0].mxu0
    %v479 = vadd.f32 %v391, %v478
    %v480 = vpop.f32.mrb[0].mxu0
    %v481 = vpop.f32.mrb[0].mxu0
    %v482 = vadd.f32 %v391, %v481
    %v483 = vpop.f32.mrb[0].mxu0
    %484 = vdwg.mxu0
    %v485 = vtanh.pop %v471
    %v486 = vtanh.pop %v474
    %v487 = vtanh.pop %v479
    %v488 = vtanh.pop %v482
    %v489 = vld [vmem:[#allocation5] sm:$0x3]
    %v491 = vsel %vm362, %v489, 0
    %493 = vmatprep.subr.mxu0 0.0
    %494 = vmatpush1.msra.mxu0 %v485
    %495 = vmatprep.subr.mxu0 0.0
    %496 = vmatpush1.msra.mxu0 %v486
    %497 = vmatprep.subr.mxu0 0.0
    %498 = vmatpush1.msra.mxu0 %v487
    %499 = vmatprep.subr.mxu0 0.0
    %500 = vmatpush1.msra.mxu0 %v488
    %501 = vmatprep.subr.mxu0 0.0
    %502 = vmatpush1.msra.mxu0 0.0
    %503 = vmatprep.subr.mxu0 0.0
    %504 = vmatpush1.msra.mxu0 0.0
    %505 = vmatprep.subr.mxu0 0.0
    %506 = vmatpush1.msra.mxu0 0.0
    %507 = vmatprep.subr.mxu0 0.0
    %508 = vmatpush1.msra.mxu0 0.0
    %509 = vmatprep.subr.mxu0 0.0
    %510 = vmatpush1.msra.mxu0 0.0
    %511 = vmatprep.subr.mxu0 0.0
    %512 = vmatpush1.msra.mxu0 0.0
    %513 = vmatprep.subr.mxu0 0.0
    %514 = vmatpush1.msra.mxu0 0.0
    %515 = vmatprep.subr.mxu0 0.0
    %516 = vmatpush1.msra.mxu0 0.0
    %517 = vmatprep.subr.mxu0 0.0
    %518 = vmatpush1.msra.mxu0 0.0
    %519 = vmatprep.subr.mxu0 0.0
    %520 = vmatpush1.msra.mxu0 0.0
    %521 = vmatprep.subr.mxu0 0.0
    %522 = vmatpush1.msra.mxu0 0.0
    %523 = vmatprep.subr.mxu0 0.0
    %524 = vmatpush1.msra.mxu0 0.0
    %525 = vmatprep.subr.mxu0 0.0
    %526 = vmatpush1.msra.mxu0 0.0
    %527 = vmatprep.subr.mxu0 0.0
    %528 = vmatpush1.msra.mxu0 0.0
    %529 = vmatprep.subr.mxu0 0.0
    %530 = vmatpush1.msra.mxu0 0.0
    %531 = vmatprep.subr.mxu0 0.0
    %532 = vmatpush1.msra.mxu0 0.0
    %533 = vmatprep.subr.mxu0 0.0
    %534 = vmatpush1.msra.mxu0 0.0
    %535 = vmatprep.subr.mxu0 0.0
    %536 = vmatpush1.msra.mxu0 0.0
    %537 = vmatprep.subr.mxu0 0.0
    %538 = vmatpush1.msra.mxu0 0.0
    %539 = vmatprep.subr.mxu0 0.0
    %540 = vmatpush1.msra.mxu0 0.0
    %541 = vmatprep.subr.mxu0 0.0
    %542 = vmatpush1.msra.mxu0 0.0
    %543 = vmatprep.subr.mxu0 0.0
    %544 = vmatpush1.msra.mxu0 0.0
    %545 = vmatprep.subr.mxu0 0.0
    %546 = vmatpush1.msra.mxu0 0.0
    %547 = vmatprep.subr.mxu0 0.0
    %548 = vmatpush1.msra.mxu0 0.0
    %549 = vmatprep.subr.mxu0 0.0
    %550 = vmatpush1.msra.mxu0 0.0
    %551 = vmatprep.subr.mxu0 0.0
    %552 = vmatpush1.msra.mxu0 0.0
    %553 = vmatprep.subr.mxu0 0.0
    %554 = vmatpush1.msra.mxu0 0.0
    %555 = vmatprep.subr.mxu0 0.0
    %556 = vmatpush1.msra.mxu0 0.0
    %557 = vmatprep.mubr.f32.mxu0 0.0
    %558 = vmatmul.mubr.f32.gmra.mrb[0].mxu0 %v491
    %v559 = vpop.f32.mrb[0].mxu0
    %v560 = vadd.f32 0.0, %v559
    %v561 = vpop.f32.mrb[0].mxu0
    %562 = vdwg.mxu0
    %563 = vst [vmem:[#allocation11] sm:$0x3] %v560
    // Predicated region
    $region42: #{tpu_custom_call.1} parent=1 // pred_check
      _
    $region43: #{tpu_custom_call.1} parent=1 // pred_check_branch
      %565 = sbr.rel (0) target = $region45
    $region44: #{tpu_custom_call.1} parent=1 // pred_region
      %s567 = ssub.s32 32, 32
      %568 = vsyncadd [#allocation4], %s567
      %s570 = sshll.u32 [#allocation11], 4
      %s571 = int_to_ptr.vmem [resolvable:$true] %s570
      %573 = dma.vmem_to_hbm [thread:$0]  %s571, 32, %s5, [#allocation4]
    $region45: #{tpu_custom_call.1} parent=1 // pred_fallthru
      _
    // Predicated region
    $region46: #{tpu_custom_call.1} parent=1 // pred_check
      _
    $region47: #{tpu_custom_call.1} parent=1 // pred_check_branch
      %575 = sbr.rel (0) target = $region49
    $region48: #{tpu_custom_call.1} parent=1 // pred_region
      %576 = dma.done [#allocation4], 32
    $region49: #{tpu_custom_call.1} parent=1 // pred_fallthru
      _
    %577 = vsyncpa [#allocation3], 1
    %578 = vsyncpa [#allocation6], 1
    %579 = vsyncpa [#allocation9], 1
    %580 = vsyncpa [#allocation4], 1

</llo_original>
